<compile_context>
chip_gen: v7x
topology: tpu7x:2x2x1
jax: 0.10.0
libtpu: 0.0.40
codegen_flags: <defaults>
</compile_context>

<pallas_src>
import math

import jax
import jax.numpy as jnp
from jax.experimental import pallas as pl
from jax.experimental.pallas import tpu as pltpu

# ---------------- problem sizes (small, consistent with the module) ----------
BATCH = 2
SEQ = 8
IN_FEATURES = 128    # base_layer.to_out[0].in_features
OUT_FEATURES = 128   # base_layer.to_out[0].out_features
R = 4                # LoRA rank
ALPHA = 1.0


# ---------------- Pallas kernel ----------------------------------------------
def lora_kernel(x_ref, wbt_ref, bb_ref, lbt_ref, lat_ref, o_ref):
    """Processes one tile of rows (tm rows of the flattened (M, IN) input).

    x_ref  : (tm, IN)   bf16 activations
    wbt_ref: (IN, OUT)  bf16 base Linear weight, pre-transposed at param prep
    bb_ref : (1, OUT)   f32  base Linear bias
    lbt_ref: (IN, R)    bf16 lora_B^T
    lat_ref: (R, OUT)   bf16 (alpha * lora_A)^T  (alpha folded in at prep)
    o_ref  : (tm, OUT)  bf16 output tile
    """
    x = x_ref[...]

    # base(x) = x @ W_base^T   (weight already transposed -> no in-kernel .T)
    base = jnp.dot(x, wbt_ref[...], preferred_element_type=jnp.float32)

    # Reassociated LoRA path: xr = x @ B^T  (tm, R), kept in f32.
    xr = jnp.dot(x, lbt_ref[...], preferred_element_type=jnp.float32)

    # Rank-r expansion on the VPU instead of a K=r MXU pass (r is tiny, static).
    lat = lat_ref[...].astype(jnp.float32)              # (R, OUT) in f32
    r_rank = lat_ref.shape[0]
    lora = xr[:, 0:1] * lat[0:1, :]
    for r in range(1, r_rank):
        lora = lora + xr[:, r:r + 1] * lat[r:r + 1, :]

    # Single f32 epilogue: bias add + LoRA add, then cast to the bf16 output.
    o_ref[...] = (base + lora + bb_ref[...]).astype(o_ref.dtype)


def _round_up(a, b):
    return (a + b - 1) // b * b


def _pick_row_tile(m, max_tile=512):
    """Row-tile selection.

    - Multiples of 16 (bf16 packs 16 rows per vreg along sublanes).
    - Up to 512 rows per tile (amortizes ~0.35 us per grid step; tile VMEM
      stays well under v7x's scoped budget).
    - Prefer a tile that divides the 16-padded row count so a ragged M does
      not get padded all the way up to a full max_tile.
    """
    m16 = _round_up(max(m, 16), 16)
    if m16 <= max_tile:
        return m16, m16
    t = max_tile
    while t >= 128:
        if m16 % t == 0:
            return t, m16
        t -= 16
    return max_tile, _round_up(m16, max_tile)


# ---------------- one-time parameter prep (hoisted out of the forward path) ---
def prepare_lora_params(w_base, b_base, lora_A, lora_B, alpha=ALPHA):
    """Layout + dtype prep done once at parameter-load time, not per forward."""
    w_base_t = jnp.asarray(w_base.T, jnp.bfloat16)               # (IN, OUT)
    bias2d = jnp.asarray(b_base.reshape(1, -1), jnp.float32)     # (1, OUT)
    lora_B_t = jnp.asarray(lora_B.T, jnp.bfloat16)               # (IN, R)
    lora_A_t = jnp.asarray((lora_A * alpha).T, jnp.bfloat16)     # (R, OUT), alpha folded
    return w_base_t, bias2d, lora_B_t, lora_A_t


# ---------------- forward -----------------------------------------------------
def lora_forward(x, w_base_t, bias2d, lora_B_t, lora_A_t):
    """x: (batch, seq, IN_FEATURES) -> (batch, seq, OUT_FEATURES) in bf16."""
    batch, seq, in_f = x.shape
    out_f = w_base_t.shape[1]
    r = lora_A_t.shape[0]
    m = batch * seq

    x2d = x.reshape(m, in_f).astype(jnp.bfloat16)

    tm, m_pad = _pick_row_tile(m)
    if m_pad != m:
        x2d = jnp.pad(x2d, ((0, m_pad - m), (0, 0)))

    grid = (m_pad // tm,)
    flops = (2 * m_pad * in_f * out_f      # base matmul (MXU)
             + 2 * m_pad * in_f * r        # x @ B^T (MXU)
             + 2 * m_pad * r * out_f)      # rank expansion (VPU)
    bytes_accessed = (x2d.size * 2 + w_base_t.size * 2 + lora_B_t.size * 2
                      + lora_A_t.size * 2 + bias2d.size * 4
                      + m_pad * out_f * 2)                     # bf16 output stream

    out2d = pl.pallas_call(
        lora_kernel,
        out_shape=jax.ShapeDtypeStruct((m_pad, out_f), jnp.bfloat16),
        grid=grid,
        in_specs=[
            pl.BlockSpec((tm, in_f), lambda i: (i, 0)),      # x rows tiled over grid
            pl.BlockSpec((in_f, out_f), lambda i: (0, 0)),   # W_base^T (resident)
            pl.BlockSpec((1, out_f), lambda i: (0, 0)),      # bias (resident)
            pl.BlockSpec((in_f, r), lambda i: (0, 0)),       # lora_B^T (resident)
            pl.BlockSpec((r, out_f), lambda i: (0, 0)),      # (alpha*lora_A)^T (resident)
        ],
        out_specs=pl.BlockSpec((tm, out_f), lambda i: (i, 0)),
        compiler_params=pltpu.CompilerParams(
            dimension_semantics=("parallel",)),
        cost_estimate=pl.CostEstimate(
            flops=flops, transcendentals=0, bytes_accessed=bytes_accessed),
    )(x2d, w_base_t, bias2d, lora_B_t, lora_A_t)

    return out2d[:m].reshape(batch, seq, out_f)


# ---------------- deterministic parameter init --------------------------------
def init_params(key):
    k_wb, k_bb, k_a, k_b, k_x = jax.random.split(key, 5)

    # Base Linear (stand-in for base_layer): W (OUT, IN), b (OUT,)
    w_base = jax.random.normal(k_wb, (OUT_FEATURES, IN_FEATURES), jnp.float32) * 0.02
    b_base = jax.random.normal(k_bb, (OUT_FEATURES,), jnp.float32) * 0.01

    # lora_A: kaiming_uniform_(a=sqrt(5)) on shape (OUT_FEATURES, R); fan_in = R.
    a = math.sqrt(5.0)
    gain = math.sqrt(2.0 / (1.0 + a * a))
    bound = gain * math.sqrt(3.0 / R)
    lora_A = jax.random.uniform(
        k_a, (OUT_FEATURES, R), jnp.float32, minval=-bound, maxval=bound
    )

    # Module init is zeros for lora_B; use small random values here so the LoRA
    # path is actually exercised (semantics are identical).
    lora_B = jax.random.normal(k_b, (R, IN_FEATURES), jnp.float32) * 0.05

    x = jax.random.normal(k_x, (BATCH, SEQ, IN_FEATURES), jnp.float32)
    return x, w_base, b_base, lora_A, lora_B


# ---------------- reference (pure JAX, f32) ------------------------------------
def lora_reference(x, w_base, b_base, lora_A, lora_B):
    lora_update = (lora_A @ lora_B) * ALPHA
    base = jnp.einsum("bsi,oi->bso", x, w_base) + b_base
    return base + jnp.einsum("bsi,oi->bso", x, lora_update)


if __name__ == "__main__":
    key = jax.random.PRNGKey(0)
    x, w_base, b_base, lora_A, lora_B = init_params(key)

    # One-time prep (param-load time), kept out of the per-call forward path.
    params = prepare_lora_params(w_base, b_base, lora_A, lora_B)

    out = lora_forward(x, *params)
    out = jax.block_until_ready(out)

    ref = lora_reference(x, w_base, b_base, lora_A, lora_B)
    assert out.shape == (BATCH, SEQ, OUT_FEATURES), out.shape
    # bf16 matmul inputs + bf16 output stream with f32 accumulation in-kernel
    # -> intentionally loosened tolerance vs the f32 reference.
    assert jnp.allclose(out.astype(jnp.float32), ref, atol=2e-2, rtol=2e-2), \
        "mismatch vs reference"

    print("KERNEL_OK")
</pallas_src>

<mosaic_0001>
module attributes {stable_mosaic.version = 11 : i64} {
  func.func @lora_kernel(%arg0: i32, %arg1: memref<16x128xbf16, #tpu.memory_space<vmem>>, %arg2: memref<128x128xbf16, #tpu.memory_space<vmem>>, %arg3: memref<1x128xf32, #tpu.memory_space<vmem>>, %arg4: memref<128x4xbf16, #tpu.memory_space<vmem>>, %arg5: memref<4x128xbf16, #tpu.memory_space<vmem>>, %arg6: memref<16x128xbf16, #tpu.memory_space<vmem>>) attributes {dimension_semantics = [#tpu.dimension_semantics<parallel>], iteration_bounds = array<i64: 1>, scalar_prefetch = 0 : i64, scratch_operands = 0 : i64, tpu.core_type = #tpu.core_type<tc>, window_params = [{transform_indices = @transform_0, window_bounds = array<i64: 16, 128>}, {pipeline_mode = #tpu.pipeline_mode<synchronous>, transform_indices = @transform_1, window_bounds = array<i64: 128, 128>}, {pipeline_mode = #tpu.pipeline_mode<synchronous>, transform_indices = @transform_2, window_bounds = array<i64: 1, 128>}, {pipeline_mode = #tpu.pipeline_mode<synchronous>, transform_indices = @transform_3, window_bounds = array<i64: 128, 4>}, {pipeline_mode = #tpu.pipeline_mode<synchronous>, transform_indices = @transform_4, window_bounds = array<i64: 4, 128>}, {transform_indices = @transform_5, window_bounds = array<i64: 16, 128>}]} {
    %c0 = arith.constant 0 : index
    %c0_0 = arith.constant 0 : index
    %0 = vector.load %arg1[%c0, %c0_0] : memref<16x128xbf16, #tpu.memory_space<vmem>>, vector<16x128xbf16>
    %c0_1 = arith.constant 0 : index
    %c0_2 = arith.constant 0 : index
    %1 = vector.load %arg2[%c0_1, %c0_2] : memref<128x128xbf16, #tpu.memory_space<vmem>>, vector<128x128xbf16>
    %cst = arith.constant dense<0.000000e+00> : vector<16x128xf32>
    %2 = tpu.matmul %0, %1, %cst {dimension_numbers = #tpu.dot_dimension_numbers<[1], [0], [0], [1], [0, 0, 1, 1], [], []>} : vector<16x128xbf16>, vector<128x128xbf16>, vector<16x128xf32> -> vector<16x128xf32>
    %c0_3 = arith.constant 0 : index
    %c0_4 = arith.constant 0 : index
    %3 = vector.load %arg4[%c0_3, %c0_4] : memref<128x4xbf16, #tpu.memory_space<vmem>>, vector<128x4xbf16>
    %cst_5 = arith.constant dense<0.000000e+00> : vector<16x4xf32>
    %4 = tpu.matmul %0, %3, %cst_5 {dimension_numbers = #tpu.dot_dimension_numbers<[1], [0], [0], [1], [0, 0, 1, 1], [], []>} : vector<16x128xbf16>, vector<128x4xbf16>, vector<16x4xf32> -> vector<16x4xf32>
    %c0_6 = arith.constant 0 : index
    %c0_7 = arith.constant 0 : index
    %5 = vector.load %arg5[%c0_6, %c0_7] : memref<4x128xbf16, #tpu.memory_space<vmem>>, vector<4x128xbf16>
    %6 = arith.extf %5 : vector<4x128xbf16> to vector<4x128xf32>
    %7 = vector.extract_strided_slice %4 {offsets = [0, 0], sizes = [16, 1], strides = [1, 1]} : vector<16x4xf32> to vector<16x1xf32>
    %8 = vector.extract_strided_slice %6 {offsets = [0, 0], sizes = [1, 128], strides = [1, 1]} : vector<4x128xf32> to vector<1x128xf32>
    %9 = vector.broadcast %7 : vector<16x1xf32> to vector<16x128xf32>
    %10 = vector.broadcast %8 : vector<1x128xf32> to vector<16x128xf32>
    %11 = arith.mulf %9, %10 : vector<16x128xf32>
    %12 = vector.extract_strided_slice %4 {offsets = [0, 1], sizes = [16, 1], strides = [1, 1]} : vector<16x4xf32> to vector<16x1xf32>
    %13 = vector.extract_strided_slice %6 {offsets = [1, 0], sizes = [1, 128], strides = [1, 1]} : vector<4x128xf32> to vector<1x128xf32>
    %14 = vector.broadcast %12 : vector<16x1xf32> to vector<16x128xf32>
    %15 = vector.broadcast %13 : vector<1x128xf32> to vector<16x128xf32>
    %16 = arith.mulf %14, %15 : vector<16x128xf32>
    %17 = arith.addf %11, %16 : vector<16x128xf32>
    %18 = vector.extract_strided_slice %4 {offsets = [0, 2], sizes = [16, 1], strides = [1, 1]} : vector<16x4xf32> to vector<16x1xf32>
    %19 = vector.extract_strided_slice %6 {offsets = [2, 0], sizes = [1, 128], strides = [1, 1]} : vector<4x128xf32> to vector<1x128xf32>
    %20 = vector.broadcast %18 : vector<16x1xf32> to vector<16x128xf32>
    %21 = vector.broadcast %19 : vector<1x128xf32> to vector<16x128xf32>
    %22 = arith.mulf %20, %21 : vector<16x128xf32>
    %23 = arith.addf %17, %22 : vector<16x128xf32>
    %24 = vector.extract_strided_slice %4 {offsets = [0, 3], sizes = [16, 1], strides = [1, 1]} : vector<16x4xf32> to vector<16x1xf32>
    %25 = vector.extract_strided_slice %6 {offsets = [3, 0], sizes = [1, 128], strides = [1, 1]} : vector<4x128xf32> to vector<1x128xf32>
    %26 = vector.broadcast %24 : vector<16x1xf32> to vector<16x128xf32>
    %27 = vector.broadcast %25 : vector<1x128xf32> to vector<16x128xf32>
    %28 = arith.mulf %26, %27 : vector<16x128xf32>
    %29 = arith.addf %23, %28 : vector<16x128xf32>
    %30 = arith.addf %2, %29 : vector<16x128xf32>
    %c0_8 = arith.constant 0 : index
    %c0_9 = arith.constant 0 : index
    %31 = vector.load %arg3[%c0_8, %c0_9] : memref<1x128xf32, #tpu.memory_space<vmem>>, vector<1x128xf32>
    %32 = vector.broadcast %31 : vector<1x128xf32> to vector<16x128xf32>
    %33 = arith.addf %30, %32 : vector<16x128xf32>
    %34 = arith.truncf %33 : vector<16x128xf32> to vector<16x128xbf16>
    %c0_10 = arith.constant 0 : index
    %c0_11 = arith.constant 0 : index
    %35 = vector.load %arg6[%c0_10, %c0_11] : memref<16x128xbf16, #tpu.memory_space<vmem>>, vector<16x128xbf16>
    tpu.vector_store %arg6[%c0_10, %c0_11], %34 {strides = array<i32>} : memref<16x128xbf16, #tpu.memory_space<vmem>>, vector<16x128xbf16>,
    return
  }
  func.func @transform_0(%arg0: i32) -> (i32, i32) {
    %c0_i32 = arith.constant 0 : i32
    %c0_i32_0 = arith.constant 0 : i32
    return %arg0, %c0_i32 : i32, i32
  }
  func.func @transform_1(%arg0: i32) -> (i32, i32) {
    %c0_i32 = arith.constant 0 : i32
    %c0_i32_0 = arith.constant 0 : i32
    %c0_i32_1 = arith.constant 0 : i32
    return %c0_i32, %c0_i32_0 : i32, i32
  }
  func.func @transform_2(%arg0: i32) -> (i32, i32) {
    %c0_i32 = arith.constant 0 : i32
    %c0_i32_0 = arith.constant 0 : i32
    %c0_i32_1 = arith.constant 0 : i32
    return %c0_i32, %c0_i32_0 : i32, i32
  }
  func.func @transform_3(%arg0: i32) -> (i32, i32) {
    %c0_i32 = arith.constant 0 : i32
    %c0_i32_0 = arith.constant 0 : i32
    %c0_i32_1 = arith.constant 0 : i32
    return %c0_i32, %c0_i32_0 : i32, i32
  }
  func.func @transform_4(%arg0: i32) -> (i32, i32) {
    %c0_i32 = arith.constant 0 : i32
    %c0_i32_0 = arith.constant 0 : i32
    %c0_i32_1 = arith.constant 0 : i32
    return %c0_i32, %c0_i32_0 : i32, i32
  }
  func.func @transform_5(%arg0: i32) -> (i32, i32) {
    %c0_i32 = arith.constant 0 : i32
    %c0_i32_0 = arith.constant 0 : i32
    return %arg0, %c0_i32 : i32, i32
  }
}

</mosaic_0001>

<llo_original>
// kernel: tpu_custom_call.1
$region0: #{tpu_custom_call.1}
  #allocation0 [shape = 'u32[]', space=smem, size = 0x4, offset = 0x4, fixed_abs, tag = 'smem constant byte address 0x4 - core index']
  #allocation1 [shape = 'u32[144,128]{1,0:T(1,128)}', space=vmem, size = 0x12000, scoped, tag = 'internal scratch']
  %s0 = inlined_call_operand.hbm [shape: bf16[16,128], index: 0, kind: input, shape index: {}]
  %s1 = inlined_call_operand.vmem [shape: bf16[128,128], index: 1, kind: input, shape index: {}]
  %s2 = inlined_call_operand.vmem [shape: f32[1,128], index: 2, kind: input, shape index: {}]
  %s3 = inlined_call_operand.vmem [shape: bf16[128,4], index: 3, kind: input, shape index: {}]
  %s4 = inlined_call_operand.vmem [shape: bf16[4,128], index: 4, kind: input, shape index: {}]
  %s5 = inlined_call_operand.hbm [shape: bf16[16,128], index: 5, kind: output, shape index: {}]
  %s6 = sld [smem:[#allocation0]]
  $region34: #{tpu_custom_call.1} parent=0
    _
  %s8 = ssub.s32 1, %s6
  %s9 = scalar_select 0, %s8, %s6
  $region1: #{tpu_custom_call.1} parent=0
    #allocation2 [shape = 'u8[4096]{0}', space=vmem, size = 0x1000, scoped, tag = 'input window, operand 0, single buffered']
    #allocation3 [shape = 's32[1]{0}', space=sflag, size = 0x4, scoped, tag = 'scoped memory for tpu_custom_call.1']
    #allocation4 [shape = 's32[1]{0}', space=sflag, size = 0x4, scoped, tag = 'scoped memory for tpu_custom_call.1']
    #allocation5 [shape = 'u8[4096]{0}', space=vmem, size = 0x1000, scoped, tag = 'output window, operand 0, single buffered']
    %10 = vsyncpa [#allocation3], 0
    %11 = vsyncpa [#allocation4], 0
    // Predicated region
    $region2: #{tpu_custom_call.1} parent=1 // pred_check
      _
    $region3: #{tpu_custom_call.1} parent=1 // pred_check_branch
      %13 = sbr.rel (0) target = $region5
    $region4: #{tpu_custom_call.1} parent=1 // pred_region
      %s15 = ssub.s32 128, 128
      %16 = vsyncadd [#allocation3], %s15
      %s17 = sshll.u32 [#allocation2], 4
      %s18 = int_to_ptr.vmem [resolvable:$true] %s17
      %23 = dma.hbm_to_vmem [thread:$0]  %s0, 128, %s18, [#allocation3], 64, 64, 4
    $region5: #{tpu_custom_call.1} parent=1 // pred_fallthru
      _
    // Predicated region
    $region6: #{tpu_custom_call.1} parent=1 // pred_check
      _
    $region7: #{tpu_custom_call.1} parent=1 // pred_check_branch
      %25 = sbr.rel (0) target = $region9
    $region8: #{tpu_custom_call.1} parent=1 // pred_region
      _
    $region9: #{tpu_custom_call.1} parent=1 // pred_fallthru
      _
    // Predicated region
    $region10: #{tpu_custom_call.1} parent=1 // pred_check
      _
    $region11: #{tpu_custom_call.1} parent=1 // pred_check_branch
      %27 = sbr.rel (0) target = $region13
    $region12: #{tpu_custom_call.1} parent=1 // pred_region
      _
    $region13: #{tpu_custom_call.1} parent=1 // pred_fallthru
      _
    // Predicated region
    $region14: #{tpu_custom_call.1} parent=1 // pred_check
      _
    $region15: #{tpu_custom_call.1} parent=1 // pred_check_branch
      %29 = sbr.rel (0) target = $region17
    $region16: #{tpu_custom_call.1} parent=1 // pred_region
      _
    $region17: #{tpu_custom_call.1} parent=1 // pred_fallthru
      _
    // Predicated region
    $region18: #{tpu_custom_call.1} parent=1 // pred_check
      _
    $region19: #{tpu_custom_call.1} parent=1 // pred_check_branch
      %31 = sbr.rel (0) target = $region21
    $region20: #{tpu_custom_call.1} parent=1 // pred_region
      _
    $region21: #{tpu_custom_call.1} parent=1 // pred_fallthru
      _
    // Predicated region
    $region22: #{tpu_custom_call.1} parent=1 // pred_check
      _
    $region23: #{tpu_custom_call.1} parent=1 // pred_check_branch
      %33 = sbr.rel (0) target = $region25
    $region24: #{tpu_custom_call.1} parent=1 // pred_region
      %34 = dma.done [#allocation3], 128
    $region25: #{tpu_custom_call.1} parent=1 // pred_fallthru
      _
    %v36 = vld [vmem:[#allocation2] sm:$0xf]
    %v37 = vld [vmem:[#allocation2 + $0x4] sm:$0xf]
    %v38 = vld [vmem:[%s1] sm:$0xf]
    %v39 = vld [vmem:[%s1 + $0x4] sm:$0xf]
    %v40 = vld [vmem:[%s1 + $0x8] sm:$0xf]
    %v41 = vld [vmem:[%s1 + $0xc] sm:$0xf]
    %v42 = vld [vmem:[%s1 + $0x10] sm:$0xf]
    %v43 = vld [vmem:[%s1 + $0x14] sm:$0xf]
    %v44 = vld [vmem:[%s1 + $0x18] sm:$0xf]
    %v45 = vld [vmem:[%s1 + $0x1c] sm:$0xf]
    %v46 = vld [vmem:[%s1 + $0x20] sm:$0xf]
    %v47 = vld [vmem:[%s1 + $0x24] sm:$0xf]
    %v48 = vld [vmem:[%s1 + $0x28] sm:$0xf]
    %v49 = vld [vmem:[%s1 + $0x2c] sm:$0xf]
    %v50 = vld [vmem:[%s1 + $0x30] sm:$0xf]
    %v51 = vld [vmem:[%s1 + $0x34] sm:$0xf]
    %v52 = vld [vmem:[%s1 + $0x38] sm:$0xf]
    %v53 = vld [vmem:[%s1 + $0x3c] sm:$0xf]
    %v54 = vld [vmem:[%s3] sm:$0xf]
    %v55 = vld [vmem:[%s3 + $0x4] sm:$0xf]
    %v56 = vld [vmem:[%s3 + $0x8] sm:$0xf]
    %v57 = vld [vmem:[%s3 + $0xc] sm:$0xf]
    %v58 = vld [vmem:[%s3 + $0x10] sm:$0xf]
    %v59 = vld [vmem:[%s3 + $0x14] sm:$0xf]
    %v60 = vld [vmem:[%s3 + $0x18] sm:$0xf]
    %v61 = vld [vmem:[%s3 + $0x1c] sm:$0xf]
    %v62 = vld [vmem:[%s3 + $0x20] sm:$0xf]
    %v63 = vld [vmem:[%s3 + $0x24] sm:$0xf]
    %v64 = vld [vmem:[%s3 + $0x28] sm:$0xf]
    %v65 = vld [vmem:[%s3 + $0x2c] sm:$0xf]
    %v66 = vld [vmem:[%s3 + $0x30] sm:$0xf]
    %v67 = vld [vmem:[%s3 + $0x34] sm:$0xf]
    %v68 = vld [vmem:[%s3 + $0x38] sm:$0xf]
    %v69 = vld [vmem:[%s3 + $0x3c] sm:$0xf]
    %v72 = vunpack.c.l.b16 %v36
    %v73 = vunpack.c.l.b16 %v37
    %v74 = vpack.c.b16 %v73, %v72
    %v92 = vunpack.c.l.b16 %v54
    %v93 = vunpack.c.l.b16 %v55
    %v94 = vunpack.c.l.b16 %v56
    %v95 = vunpack.c.l.b16 %v57
    %v96 = vunpack.c.l.b16 %v58
    %v97 = vunpack.c.l.b16 %v59
    %v98 = vunpack.c.l.b16 %v60
    %v99 = vunpack.c.l.b16 %v61
    %v100 = vunpack.c.l.b16 %v62
    %v101 = vunpack.c.l.b16 %v63
    %v102 = vunpack.c.l.b16 %v64
    %v103 = vunpack.c.l.b16 %v65
    %v104 = vunpack.c.l.b16 %v66
    %v105 = vunpack.c.l.b16 %v67
    %v106 = vunpack.c.l.b16 %v68
    %v107 = vunpack.c.l.b16 %v69
    %v108 = vpack.c.b16 %v93, %v92
    %v109 = vpack.c.b16 %v95, %v94
    %v110 = vpack.c.b16 %v97, %v96
    %v111 = vpack.c.b16 %v99, %v98
    %v112 = vpack.c.b16 %v101, %v100
    %v113 = vpack.c.b16 %v103, %v102
    %v114 = vpack.c.b16 %v105, %v104
    %v115 = vpack.c.b16 %v107, %v106
    %124 = vmatprep.subr.bf16.mxu0 0
    %125 = vmatpush1.bf16.msra.mxu0 %v108
    %126 = vmatprep.subr.bf16.mxu0 0
    %127 = vmatpush1.bf16.msra.mxu0 %v109
    %128 = vmatprep.subr.bf16.mxu0 0
    %129 = vmatpush1.bf16.msra.mxu0 %v110
    %130 = vmatprep.subr.bf16.mxu0 0
    %131 = vmatpush1.bf16.msra.mxu0 %v111
    %132 = vmatprep.subr.bf16.mxu0 0
    %133 = vmatpush1.bf16.msra.mxu0 %v112
    %134 = vmatprep.subr.bf16.mxu0 0
    %135 = vmatpush1.bf16.msra.mxu0 %v113
    %136 = vmatprep.subr.bf16.mxu0 0
    %137 = vmatpush1.bf16.msra.mxu0 %v114
    %138 = vmatprep.subr.bf16.mxu0 0
    %139 = vmatpush1.bf16.msra.mxu0 %v115
    %140 = vmatprep.subr.bf16.mxu0 0
    %141 = vmatpush1.bf16.msra.mxu0 0
    %142 = vmatprep.subr.bf16.mxu0 0
    %143 = vmatpush1.bf16.msra.mxu0 0
    %144 = vmatprep.subr.bf16.mxu0 0
    %145 = vmatpush1.bf16.msra.mxu0 0
    %146 = vmatprep.subr.bf16.mxu0 0
    %147 = vmatpush1.bf16.msra.mxu0 0
    %148 = vmatprep.subr.bf16.mxu0 0
    %149 = vmatpush1.bf16.msra.mxu0 0
    %150 = vmatprep.subr.bf16.mxu0 0
    %151 = vmatpush1.bf16.msra.mxu0 0
    %152 = vmatprep.subr.bf16.mxu0 0
    %153 = vmatpush1.bf16.msra.mxu0 0
    %154 = vmatprep.subr.bf16.mxu0 0
    %155 = vmatpush1.bf16.msra.mxu0 0
    %156 = vmatprep.mubr.bf16.mxu0 0
    %157 = vmatmul.mubr.bf16.gmra.mrb[0].mxu0 %v74
    %v158 = vpop.f32.mrb[0].mxu0
    %v159 = vadd.f32 0.0, %v158
    %v160 = vpop.f32.mrb[0].mxu0
    %v161 = vpop.f32.mrb[0].mxu0
    %v162 = vadd.f32 0.0, %v161
    %v163 = vpop.f32.mrb[0].mxu0
    %164 = vdwg.mxu0
    %v165 = vld [vmem:[%s4] sm:$0x3]
    %v166 = vunpack.c.l.bf16 %v165
    %168 = vset.pattern.permute.xlu0 0
    %169 = vperm.xlu0 %168, %v159
    %v170 = vpop.permute.xlu0 %169
    %173 = vset.pattern.permute.xlu0 0
    %174 = vperm.xlu0 %173, %v162
    %v175 = vpop.permute.xlu0 %174
    %v177 = vlaneseq
    %v178 = vshrl.u32 %v177, 7
    %v179 = vsub.s32 0, %v178
    %v180 = vrot.slane %v166, %v179
    %v181 = vmul.f32 %v170, %v180
    %v182 = vmul.f32 %v175, %v180
    %183 = vset.pattern.permute.xlu0 1
    %184 = vperm.xlu0 %183, %v159
    %v185 = vpop.permute.xlu0 %184
    %187 = vset.pattern.permute.xlu0 1
    %188 = vperm.xlu0 %187, %v162
    %v189 = vpop.permute.xlu0 %188
    %v191 = vlaneseq
    %v192 = vshrl.u32 %v191, 7
    %v193 = vsub.s32 1, %v192
    %v194 = vrot.slane %v166, %v193
    %v195 = vmul.f32 %v185, %v194
    %v196 = vmul.f32 %v189, %v194
    %v197 = vadd.f32 %v181, %v195
    %v198 = vadd.f32 %v182, %v196
    %199 = vset.pattern.permute.xlu0 2
    %200 = vperm.xlu0 %199, %v159
    %v201 = vpop.permute.xlu0 %200
    %203 = vset.pattern.permute.xlu0 2
    %204 = vperm.xlu0 %203, %v162
    %v205 = vpop.permute.xlu0 %204
    %v207 = vlaneseq
    %v208 = vshrl.u32 %v207, 7
    %v209 = vsub.s32 2, %v208
    %v210 = vrot.slane %v166, %v209
    %v211 = vmul.f32 %v201, %v210
    %v212 = vmul.f32 %v205, %v210
    %v213 = vadd.f32 %v197, %v211
    %v214 = vadd.f32 %v198, %v212
    %215 = vset.pattern.permute.xlu0 3
    %216 = vperm.xlu0 %215, %v159
    %v217 = vpop.permute.xlu0 %216
    %219 = vset.pattern.permute.xlu0 3
    %220 = vperm.xlu0 %219, %v162
    %v221 = vpop.permute.xlu0 %220
    %v223 = vlaneseq
    %v224 = vshrl.u32 %v223, 7
    %v225 = vsub.s32 3, %v224
    %v226 = vrot.slane %v166, %v225
    %v227 = vmul.f32 %v217, %v226
    %v228 = vmul.f32 %v221, %v226
    %v229 = vadd.f32 %v213, %v227
    %v230 = vadd.f32 %v214, %v228
    %v247 = vunpack.c.l.b16 %v38
    %v248 = vunpack.c.l.b16 %v39
    %v249 = vunpack.c.l.b16 %v40
    %v250 = vunpack.c.l.b16 %v41
    %v251 = vunpack.c.l.b16 %v42
    %v252 = vunpack.c.l.b16 %v43
    %v253 = vunpack.c.l.b16 %v44
    %v254 = vunpack.c.l.b16 %v45
    %v255 = vunpack.c.l.b16 %v46
    %v256 = vunpack.c.l.b16 %v47
    %v257 = vunpack.c.l.b16 %v48
    %v258 = vunpack.c.l.b16 %v49
    %v259 = vunpack.c.l.b16 %v50
    %v260 = vunpack.c.l.b16 %v51
    %v261 = vunpack.c.l.b16 %v52
    %v262 = vunpack.c.l.b16 %v53
    %v263 = vpack.c.b16 %v248, %v247
    %v264 = vpack.c.b16 %v250, %v249
    %v265 = vpack.c.b16 %v252, %v251
    %v266 = vpack.c.b16 %v254, %v253
    %v267 = vpack.c.b16 %v256, %v255
    %v268 = vpack.c.b16 %v258, %v257
    %v269 = vpack.c.b16 %v260, %v259
    %v270 = vpack.c.b16 %v262, %v261
    %279 = vmatprep.subr.bf16.mxu0 0
    %280 = vmatpush1.bf16.msra.mxu0 %v263
    %281 = vmatprep.subr.bf16.mxu0 0
    %282 = vmatpush1.bf16.msra.mxu0 %v264
    %283 = vmatprep.subr.bf16.mxu0 0
    %284 = vmatpush1.bf16.msra.mxu0 %v265
    %285 = vmatprep.subr.bf16.mxu0 0
    %286 = vmatpush1.bf16.msra.mxu0 %v266
    %287 = vmatprep.subr.bf16.mxu0 0
    %288 = vmatpush1.bf16.msra.mxu0 %v267
    %289 = vmatprep.subr.bf16.mxu0 0
    %290 = vmatpush1.bf16.msra.mxu0 %v268
    %291 = vmatprep.subr.bf16.mxu0 0
    %292 = vmatpush1.bf16.msra.mxu0 %v269
    %293 = vmatprep.subr.bf16.mxu0 0
    %294 = vmatpush1.bf16.msra.mxu0 %v270
    %295 = vmatprep.subr.bf16.mxu0 0
    %296 = vmatpush1.bf16.msra.mxu0 0
    %297 = vmatprep.subr.bf16.mxu0 0
    %298 = vmatpush1.bf16.msra.mxu0 0
    %299 = vmatprep.subr.bf16.mxu0 0
    %300 = vmatpush1.bf16.msra.mxu0 0
    %301 = vmatprep.subr.bf16.mxu0 0
    %302 = vmatpush1.bf16.msra.mxu0 0
    %303 = vmatprep.subr.bf16.mxu0 0
    %304 = vmatpush1.bf16.msra.mxu0 0
    %305 = vmatprep.subr.bf16.mxu0 0
    %306 = vmatpush1.bf16.msra.mxu0 0
    %307 = vmatprep.subr.bf16.mxu0 0
    %308 = vmatpush1.bf16.msra.mxu0 0
    %309 = vmatprep.subr.bf16.mxu0 0
    %310 = vmatpush1.bf16.msra.mxu0 0
    %311 = vmatprep.mubr.bf16.mxu0 0
    %312 = vmatmul.mubr.bf16.gmra.mrb[0].mxu0 %v74
    %v313 = vpop.f32.mrb[0].mxu0
    %v314 = vadd.f32 %v229, %v313
    %v315 = vpop.f32.mrb[0].mxu0
    %v316 = vpop.f32.mrb[0].mxu0
    %v317 = vadd.f32 %v230, %v316
    %v318 = vpop.f32.mrb[0].mxu0
    %319 = vdwg.mxu0
    %v320 = vld [vmem:[%s2] sm:$0x1]
    %v322 = vlaneseq
    %v323 = vshrl.u32 %v322, 7
    %v324 = vsub.s32 0, %v323
    %v325 = vrot.slane %v320, %v324
    %v327 = vadd.f32 %v314, %v325
    %v328 = vadd.f32 %v317, %v325
    %v329 = vpack.c.bf16 %v328, %v327
    %v331 = vunpack.c.l.b16 %v329
    %v332 = vunpack.c.h.b16 %v329
    %v333 = vpack.c.b16 %v331, %v331
    %v334 = vpack.c.b16 %v332, %v332
    %337 = vst [vmem:[#allocation5] sm:$0xf] %v333
    %338 = vst [vmem:[#allocation5 + $0x4] sm:$0xf] %v334
    // Predicated region
    $region26: #{tpu_custom_call.1} parent=1 // pred_check
      _
    $region27: #{tpu_custom_call.1} parent=1 // pred_check_branch
      %340 = sbr.rel (0) target = $region29
    $region28: #{tpu_custom_call.1} parent=1 // pred_region
      %s342 = ssub.s32 128, 128
      %343 = vsyncadd [#allocation4], %s342
      %s344 = sshll.u32 [#allocation5], 4
      %s345 = int_to_ptr.vmem [resolvable:$true] %s344
      %350 = dma.vmem_to_hbm [thread:$0]  %s345, 128, %s5, [#allocation4], 64, 64, 4
    $region29: #{tpu_custom_call.1} parent=1 // pred_fallthru
      _
    // Predicated region
    $region30: #{tpu_custom_call.1} parent=1 // pred_check
      _
    $region31: #{tpu_custom_call.1} parent=1 // pred_check_branch
      %352 = sbr.rel (0) target = $region33
    $region32: #{tpu_custom_call.1} parent=1 // pred_region
      %353 = dma.done [#allocation4], 128
    $region33: #{tpu_custom_call.1} parent=1 // pred_fallthru
      _
    %354 = vsyncpa [#allocation3], 1
    %355 = vsyncpa [#allocation4], 1

</llo_original>
